<compile_context>
chip_gen: v6e
topology: v6e:2x2x1
jax: 0.10.0
libtpu: 0.0.40
codegen_flags: <defaults>
</compile_context>

<pallas_src>
import functools

import jax
import jax.numpy as jnp
import numpy as np
from jax.experimental import pallas as pl
from jax.experimental.pallas import tpu as pltpu

# ---- model hyper-params (from the PyTorch module) ----
HIDDEN_SIZE = 2
INPUT_SIZE = 7
NUM_CLASSES = 1
NUM_LAYERS = 1          # kernel implements the single-layer case
SEQ_LENGTH = 8
BATCH = 2


def lstm_fc_kernel(x_ref, lstm_ref, head_ref, out_ref, *, seq_len, batch):
    """Whole forward pass in VMEM.

    x_ref:    (T*B, D_in)   time-major rows: rows [t*B:(t+1)*B] = timestep t
    lstm_ref: (D_in + H + 1, 4H)  rows [0:D]=W_ih^T, [D:D+H]=W_hh^T, [D+H]=b
              gate columns pre-permuted to (i, f, o, g)
    head_ref: (H + 3, 128)  rows [0:H]=fc1_W^T, [H]=fc1_b, [H+1]=fc2_W row,
              [H+2]=fc2_b broadcast over lanes
    out_ref:  (B, 1)
    """
    T, B = seq_len, batch
    D = x_ref.shape[1]
    GH = lstm_ref.shape[1]
    H = GH // 4

    w_ih = lstm_ref[0:D, :]                       # (D, 4H)
    b = lstm_ref[D + H:D + H + 1, :]              # (1, 4H)
    w_hh_rows = [lstm_ref[D + j:D + j + 1, :] for j in range(H)]   # each (1, 4H)

    # --- hoisted input projection: one MXU matmul + one bias add for all T ---
    xproj = jnp.dot(x_ref[...], w_ih,
                    preferred_element_type=jnp.float32) + b        # (T*B, 4H)

    h = jnp.zeros((B, H), jnp.float32)
    c = jnp.zeros((B, H), jnp.float32)

    # T is small and static -> unrolled recurrence (sequential by nature).
    for t in range(T):
        # recurrent term on the VPU: sum_j h[:, j] * W_hh^T[j, :]
        rec = h[:, 0:1] * w_hh_rows[0]
        for j in range(1, H):
            rec = rec + h[:, j:j + 1] * w_hh_rows[j]
        gates = xproj[t * B:(t + 1) * B, :] + rec                  # (B, 4H)

        # gate order is (i, f, o, g): one sigmoid group + one tanh group
        sig = jax.nn.sigmoid(gates[:, 0:3 * H])
        i_g = sig[:, 0:H]
        f_g = sig[:, H:2 * H]
        o_g = sig[:, 2 * H:3 * H]
        g_g = jnp.tanh(gates[:, 3 * H:4 * H])

        c = f_g * c + i_g * g_g
        h = o_g * jnp.tanh(c)

    # --- head: relu -> fc1 (VPU mul-adds) -> relu -> fc2 (VPU mul + lane reduce)
    hr = jnp.maximum(h, 0.0)
    acc1 = hr[:, 0:1] * head_ref[0:1, :]
    for j in range(1, H):
        acc1 = acc1 + hr[:, j:j + 1] * head_ref[j:j + 1, :]
    out1 = jnp.maximum(acc1 + head_ref[H:H + 1, :], 0.0)           # (B, 128)

    prod = out1 * head_ref[H + 1:H + 2, :]                         # (B, 128)
    out2 = (jnp.sum(prod, axis=-1, keepdims=True)
            + head_ref[H + 2:H + 3, 0:1])                          # (B, 1)
    out_ref[...] = out2.astype(out_ref.dtype)


def pack_params(params):
    """One-time packing (outside the jitted forward): transposes, gate
    permutation (i,f,g,o) -> (i,f,o,g), bias folding, operand consolidation."""
    H = params["w_hh"].shape[1]
    D = params["w_ih"].shape[1]
    C = params["fc2_w"].shape[0]
    assert C == 1, "lane-reduce head assumes num_classes == 1"

    # permute gate blocks from PyTorch (i, f, g, o) to (i, f, o, g)
    perm = np.concatenate([np.arange(0, H), np.arange(H, 2 * H),
                           np.arange(3 * H, 4 * H), np.arange(2 * H, 3 * H)])

    w_ih_t = jnp.asarray(params["w_ih"], jnp.float32).T[:, perm]    # (D, 4H)
    w_hh_t = jnp.asarray(params["w_hh"], jnp.float32).T[:, perm]    # (H, 4H)
    b = (jnp.asarray(params["b_ih"], jnp.float32)
         + jnp.asarray(params["b_hh"], jnp.float32))[perm].reshape(1, 4 * H)
    lstm_pack = jnp.concatenate([w_ih_t, w_hh_t, b], axis=0)        # (D+H+1, 4H)

    fc1_w_t = jnp.asarray(params["fc1_w"], jnp.float32).T           # (H, 128)
    fc1_b = jnp.asarray(params["fc1_b"], jnp.float32).reshape(1, -1)
    fc2_w = jnp.asarray(params["fc2_w"], jnp.float32)               # (1, 128)
    fc2_b = jnp.broadcast_to(
        jnp.asarray(params["fc2_b"], jnp.float32).reshape(1, 1), (1, 128))
    head_pack = jnp.concatenate([fc1_w_t, fc1_b, fc2_w, fc2_b], axis=0)

    return lstm_pack, head_pack


@jax.jit
def lstm_forward(x, lstm_pack, head_pack):
    """x: (B, T, D_in) float32, packed weights from pack_params()."""
    B, T, D = x.shape
    C = NUM_CLASSES

    # time-major flat layout so each timestep is a contiguous sublane slice
    x_2d = jnp.transpose(x, (1, 0, 2)).reshape(T * B, D).astype(jnp.float32)

    vmem = pl.BlockSpec(memory_space=pltpu.MemorySpace.VMEM)
    return pl.pallas_call(
        functools.partial(lstm_fc_kernel, seq_len=T, batch=B),
        out_shape=jax.ShapeDtypeStruct((B, C), jnp.float32),
        in_specs=[vmem, vmem, vmem],
        out_specs=vmem,
    )(x_2d, lstm_pack, head_pack)


def _reference_forward(x, params):
    """Pure-JAX reference (PyTorch gate order / activations) for checking."""
    B = x.shape[0]
    H = params["w_hh"].shape[1]
    h = jnp.zeros((B, H), jnp.float32)
    c = jnp.zeros((B, H), jnp.float32)
    w_ih_t = params["w_ih"].T
    w_hh_t = params["w_hh"].T
    b = (params["b_ih"] + params["b_hh"])[None, :]
    for t in range(x.shape[1]):
        gates = x[:, t, :] @ w_ih_t + h @ w_hh_t + b
        i_g = jax.nn.sigmoid(gates[:, 0 * H:1 * H])
        f_g = jax.nn.sigmoid(gates[:, 1 * H:2 * H])
        g_g = jnp.tanh(gates[:, 2 * H:3 * H])
        o_g = jax.nn.sigmoid(gates[:, 3 * H:4 * H])
        c = f_g * c + i_g * g_g
        h = o_g * jnp.tanh(c)
    out = jnp.maximum(h, 0.0)
    out = jnp.maximum(out @ params["fc1_w"].T + params["fc1_b"], 0.0)
    return out @ params["fc2_w"].T + params["fc2_b"]


def init_params(key):
    """Deterministic synthetic parameters with the module's shapes."""
    ks = jax.random.split(key, 8)
    H, D, C = HIDDEN_SIZE, INPUT_SIZE, NUM_CLASSES
    s = 1.0 / np.sqrt(H)
    u = lambda k, shape, lim: jax.random.uniform(k, shape, jnp.float32, -lim, lim)
    return {
        "w_ih": u(ks[0], (4 * H, D), s),      # nn.LSTM weight_ih_l0
        "w_hh": u(ks[1], (4 * H, H), s),      # nn.LSTM weight_hh_l0
        "b_ih": u(ks[2], (4 * H,), s),
        "b_hh": u(ks[3], (4 * H,), s),
        "fc1_w": u(ks[4], (128, H), 1.0 / np.sqrt(H)),     # nn.Linear(H, 128)
        "fc1_b": u(ks[5], (128,), 1.0 / np.sqrt(H)),
        "fc2_w": u(ks[6], (C, 128), 1.0 / np.sqrt(128)),   # nn.Linear(128, C)
        "fc2_b": u(ks[7], (C,), 1.0 / np.sqrt(128)),
    }


if __name__ == "__main__":
    key = jax.random.PRNGKey(0)
    k_x, k_p = jax.random.split(key)
    x = jax.random.normal(k_x, (BATCH, SEQ_LENGTH, INPUT_SIZE), jnp.float32)
    params = init_params(k_p)

    # pack weights ONCE, outside the jitted forward
    lstm_pack, head_pack = pack_params(params)
    lstm_pack = jax.block_until_ready(lstm_pack)
    head_pack = jax.block_until_ready(head_pack)

    out = lstm_forward(x, lstm_pack, head_pack)
    out = jax.block_until_ready(out)

    ref = _reference_forward(x, params)
    assert out.shape == (BATCH, NUM_CLASSES), out.shape
    np.testing.assert_allclose(np.asarray(out), np.asarray(ref),
                               rtol=1e-5, atol=1e-5)
    print("KERNEL_OK")
</pallas_src>

<mosaic_0001>
module attributes {stable_mosaic.version = 11 : i64} {
  func.func @lstm_fc_kernel(%arg0: memref<16x7xf32, #tpu.memory_space<vmem>>, %arg1: memref<10x8xf32, #tpu.memory_space<vmem>>, %arg2: memref<5x128xf32, #tpu.memory_space<vmem>>, %arg3: memref<2x1xf32, #tpu.memory_space<vmem>>) attributes {dimension_semantics = [], scalar_prefetch = 0 : i64, scratch_operands = 0 : i64, tpu.core_type = #tpu.core_type<tc>} {
    %c0 = arith.constant 0 : index
    %c0_0 = arith.constant 0 : index
    %0 = vector.load %arg1[%c0, %c0_0] : memref<10x8xf32, #tpu.memory_space<vmem>>, vector<7x8xf32>
    %c9 = arith.constant 9 : index
    %c0_1 = arith.constant 0 : index
    %1 = vector.load %arg1[%c9, %c0_1] : memref<10x8xf32, #tpu.memory_space<vmem>>, vector<1x8xf32>
    %c7 = arith.constant 7 : index
    %c0_2 = arith.constant 0 : index
    %2 = vector.load %arg1[%c7, %c0_2] : memref<10x8xf32, #tpu.memory_space<vmem>>, vector<1x8xf32>
    %c8 = arith.constant 8 : index
    %c0_3 = arith.constant 0 : index
    %3 = vector.load %arg1[%c8, %c0_3] : memref<10x8xf32, #tpu.memory_space<vmem>>, vector<1x8xf32>
    %c0_4 = arith.constant 0 : index
    %c0_5 = arith.constant 0 : index
    %4 = vector.load %arg0[%c0_4, %c0_5] : memref<16x7xf32, #tpu.memory_space<vmem>>, vector<16x7xf32>
    %cst = arith.constant dense<0.000000e+00> : vector<16x8xf32>
    %5 = tpu.matmul %4, %0, %cst {dimension_numbers = #tpu.dot_dimension_numbers<[1], [0], [0], [1], [0, 0, 1, 1], [], []>} : vector<16x7xf32>, vector<7x8xf32>, vector<16x8xf32> -> vector<16x8xf32>
    %6 = vector.broadcast %1 : vector<1x8xf32> to vector<16x8xf32>
    %7 = arith.addf %5, %6 : vector<16x8xf32>
    %cst_6 = arith.constant 0.000000e+00 : f32
    %8 = vector.broadcast %cst_6 : f32 to vector<2x2xf32>
    %cst_7 = arith.constant 0.000000e+00 : f32
    %9 = vector.broadcast %cst_7 : f32 to vector<2x2xf32>
    %10 = vector.extract_strided_slice %8 {offsets = [0, 0], sizes = [2, 1], strides = [1, 1]} : vector<2x2xf32> to vector<2x1xf32>
    %11 = vector.broadcast %10 : vector<2x1xf32> to vector<2x8xf32>
    %12 = vector.broadcast %2 : vector<1x8xf32> to vector<2x8xf32>
    %13 = arith.mulf %11, %12 : vector<2x8xf32>
    %14 = vector.extract_strided_slice %8 {offsets = [0, 1], sizes = [2, 1], strides = [1, 1]} : vector<2x2xf32> to vector<2x1xf32>
    %15 = vector.broadcast %14 : vector<2x1xf32> to vector<2x8xf32>
    %16 = vector.broadcast %3 : vector<1x8xf32> to vector<2x8xf32>
    %17 = arith.mulf %15, %16 : vector<2x8xf32>
    %18 = arith.addf %13, %17 : vector<2x8xf32>
    %19 = vector.extract_strided_slice %7 {offsets = [0, 0], sizes = [2, 8], strides = [1, 1]} : vector<16x8xf32> to vector<2x8xf32>
    %20 = arith.addf %19, %18 : vector<2x8xf32>
    %21 = vector.extract_strided_slice %20 {offsets = [0, 0], sizes = [2, 6], strides = [1, 1]} : vector<2x8xf32> to vector<2x6xf32>
    %22 = arith.negf %21 : vector<2x6xf32>
    %23 = math.exp %22 : vector<2x6xf32>
    %cst_8 = arith.constant 1.000000e+00 : f32
    %24 = vector.broadcast %cst_8 : f32 to vector<2x6xf32>
    %25 = arith.addf %24, %23 : vector<2x6xf32>
    %26 = arith.divf %24, %25 : vector<2x6xf32>
    %27 = vector.extract_strided_slice %26 {offsets = [0, 0], sizes = [2, 2], strides = [1, 1]} : vector<2x6xf32> to vector<2x2xf32>
    %28 = vector.extract_strided_slice %26 {offsets = [0, 2], sizes = [2, 2], strides = [1, 1]} : vector<2x6xf32> to vector<2x2xf32>
    %29 = vector.extract_strided_slice %26 {offsets = [0, 4], sizes = [2, 2], strides = [1, 1]} : vector<2x6xf32> to vector<2x2xf32>
    %30 = vector.extract_strided_slice %20 {offsets = [0, 6], sizes = [2, 2], strides = [1, 1]} : vector<2x8xf32> to vector<2x2xf32>
    %31 = math.tanh %30 : vector<2x2xf32>
    %32 = arith.mulf %28, %9 : vector<2x2xf32>
    %33 = arith.mulf %27, %31 : vector<2x2xf32>
    %34 = arith.addf %32, %33 : vector<2x2xf32>
    %35 = math.tanh %34 : vector<2x2xf32>
    %36 = arith.mulf %29, %35 : vector<2x2xf32>
    %37 = vector.extract_strided_slice %36 {offsets = [0, 0], sizes = [2, 1], strides = [1, 1]} : vector<2x2xf32> to vector<2x1xf32>
    %38 = vector.broadcast %37 : vector<2x1xf32> to vector<2x8xf32>
    %39 = vector.broadcast %2 : vector<1x8xf32> to vector<2x8xf32>
    %40 = arith.mulf %38, %39 : vector<2x8xf32>
    %41 = vector.extract_strided_slice %36 {offsets = [0, 1], sizes = [2, 1], strides = [1, 1]} : vector<2x2xf32> to vector<2x1xf32>
    %42 = vector.broadcast %41 : vector<2x1xf32> to vector<2x8xf32>
    %43 = vector.broadcast %3 : vector<1x8xf32> to vector<2x8xf32>
    %44 = arith.mulf %42, %43 : vector<2x8xf32>
    %45 = arith.addf %40, %44 : vector<2x8xf32>
    %46 = vector.extract_strided_slice %7 {offsets = [2, 0], sizes = [2, 8], strides = [1, 1]} : vector<16x8xf32> to vector<2x8xf32>
    %47 = arith.addf %46, %45 : vector<2x8xf32>
    %48 = vector.extract_strided_slice %47 {offsets = [0, 0], sizes = [2, 6], strides = [1, 1]} : vector<2x8xf32> to vector<2x6xf32>
    %49 = arith.negf %48 : vector<2x6xf32>
    %50 = math.exp %49 : vector<2x6xf32>
    %cst_9 = arith.constant 1.000000e+00 : f32
    %51 = vector.broadcast %cst_9 : f32 to vector<2x6xf32>
    %52 = arith.addf %51, %50 : vector<2x6xf32>
    %53 = arith.divf %51, %52 : vector<2x6xf32>
    %54 = vector.extract_strided_slice %53 {offsets = [0, 0], sizes = [2, 2], strides = [1, 1]} : vector<2x6xf32> to vector<2x2xf32>
    %55 = vector.extract_strided_slice %53 {offsets = [0, 2], sizes = [2, 2], strides = [1, 1]} : vector<2x6xf32> to vector<2x2xf32>
    %56 = vector.extract_strided_slice %53 {offsets = [0, 4], sizes = [2, 2], strides = [1, 1]} : vector<2x6xf32> to vector<2x2xf32>
    %57 = vector.extract_strided_slice %47 {offsets = [0, 6], sizes = [2, 2], strides = [1, 1]} : vector<2x8xf32> to vector<2x2xf32>
    %58 = math.tanh %57 : vector<2x2xf32>
    %59 = arith.mulf %55, %34 : vector<2x2xf32>
    %60 = arith.mulf %54, %58 : vector<2x2xf32>
    %61 = arith.addf %59, %60 : vector<2x2xf32>
    %62 = math.tanh %61 : vector<2x2xf32>
    %63 = arith.mulf %56, %62 : vector<2x2xf32>
    %64 = vector.extract_strided_slice %63 {offsets = [0, 0], sizes = [2, 1], strides = [1, 1]} : vector<2x2xf32> to vector<2x1xf32>
    %65 = vector.broadcast %64 : vector<2x1xf32> to vector<2x8xf32>
    %66 = vector.broadcast %2 : vector<1x8xf32> to vector<2x8xf32>
    %67 = arith.mulf %65, %66 : vector<2x8xf32>
    %68 = vector.extract_strided_slice %63 {offsets = [0, 1], sizes = [2, 1], strides = [1, 1]} : vector<2x2xf32> to vector<2x1xf32>
    %69 = vector.broadcast %68 : vector<2x1xf32> to vector<2x8xf32>
    %70 = vector.broadcast %3 : vector<1x8xf32> to vector<2x8xf32>
    %71 = arith.mulf %69, %70 : vector<2x8xf32>
    %72 = arith.addf %67, %71 : vector<2x8xf32>
    %73 = vector.extract_strided_slice %7 {offsets = [4, 0], sizes = [2, 8], strides = [1, 1]} : vector<16x8xf32> to vector<2x8xf32>
    %74 = arith.addf %73, %72 : vector<2x8xf32>
    %75 = vector.extract_strided_slice %74 {offsets = [0, 0], sizes = [2, 6], strides = [1, 1]} : vector<2x8xf32> to vector<2x6xf32>
    %76 = arith.negf %75 : vector<2x6xf32>
    %77 = math.exp %76 : vector<2x6xf32>
    %cst_10 = arith.constant 1.000000e+00 : f32
    %78 = vector.broadcast %cst_10 : f32 to vector<2x6xf32>
    %79 = arith.addf %78, %77 : vector<2x6xf32>
    %80 = arith.divf %78, %79 : vector<2x6xf32>
    %81 = vector.extract_strided_slice %80 {offsets = [0, 0], sizes = [2, 2], strides = [1, 1]} : vector<2x6xf32> to vector<2x2xf32>
    %82 = vector.extract_strided_slice %80 {offsets = [0, 2], sizes = [2, 2], strides = [1, 1]} : vector<2x6xf32> to vector<2x2xf32>
    %83 = vector.extract_strided_slice %80 {offsets = [0, 4], sizes = [2, 2], strides = [1, 1]} : vector<2x6xf32> to vector<2x2xf32>
    %84 = vector.extract_strided_slice %74 {offsets = [0, 6], sizes = [2, 2], strides = [1, 1]} : vector<2x8xf32> to vector<2x2xf32>
    %85 = math.tanh %84 : vector<2x2xf32>
    %86 = arith.mulf %82, %61 : vector<2x2xf32>
    %87 = arith.mulf %81, %85 : vector<2x2xf32>
    %88 = arith.addf %86, %87 : vector<2x2xf32>
    %89 = math.tanh %88 : vector<2x2xf32>
    %90 = arith.mulf %83, %89 : vector<2x2xf32>
    %91 = vector.extract_strided_slice %90 {offsets = [0, 0], sizes = [2, 1], strides = [1, 1]} : vector<2x2xf32> to vector<2x1xf32>
    %92 = vector.broadcast %91 : vector<2x1xf32> to vector<2x8xf32>
    %93 = vector.broadcast %2 : vector<1x8xf32> to vector<2x8xf32>
    %94 = arith.mulf %92, %93 : vector<2x8xf32>
    %95 = vector.extract_strided_slice %90 {offsets = [0, 1], sizes = [2, 1], strides = [1, 1]} : vector<2x2xf32> to vector<2x1xf32>
    %96 = vector.broadcast %95 : vector<2x1xf32> to vector<2x8xf32>
    %97 = vector.broadcast %3 : vector<1x8xf32> to vector<2x8xf32>
    %98 = arith.mulf %96, %97 : vector<2x8xf32>
    %99 = arith.addf %94, %98 : vector<2x8xf32>
    %100 = vector.extract_strided_slice %7 {offsets = [6, 0], sizes = [2, 8], strides = [1, 1]} : vector<16x8xf32> to vector<2x8xf32>
    %101 = arith.addf %100, %99 : vector<2x8xf32>
    %102 = vector.extract_strided_slice %101 {offsets = [0, 0], sizes = [2, 6], strides = [1, 1]} : vector<2x8xf32> to vector<2x6xf32>
    %103 = arith.negf %102 : vector<2x6xf32>
    %104 = math.exp %103 : vector<2x6xf32>
    %cst_11 = arith.constant 1.000000e+00 : f32
    %105 = vector.broadcast %cst_11 : f32 to vector<2x6xf32>
    %106 = arith.addf %105, %104 : vector<2x6xf32>
    %107 = arith.divf %105, %106 : vector<2x6xf32>
    %108 = vector.extract_strided_slice %107 {offsets = [0, 0], sizes = [2, 2], strides = [1, 1]} : vector<2x6xf32> to vector<2x2xf32>
    %109 = vector.extract_strided_slice %107 {offsets = [0, 2], sizes = [2, 2], strides = [1, 1]} : vector<2x6xf32> to vector<2x2xf32>
    %110 = vector.extract_strided_slice %107 {offsets = [0, 4], sizes = [2, 2], strides = [1, 1]} : vector<2x6xf32> to vector<2x2xf32>
    %111 = vector.extract_strided_slice %101 {offsets = [0, 6], sizes = [2, 2], strides = [1, 1]} : vector<2x8xf32> to vector<2x2xf32>
    %112 = math.tanh %111 : vector<2x2xf32>
    %113 = arith.mulf %109, %88 : vector<2x2xf32>
    %114 = arith.mulf %108, %112 : vector<2x2xf32>
    %115 = arith.addf %113, %114 : vector<2x2xf32>
    %116 = math.tanh %115 : vector<2x2xf32>
    %117 = arith.mulf %110, %116 : vector<2x2xf32>
    %118 = vector.extract_strided_slice %117 {offsets = [0, 0], sizes = [2, 1], strides = [1, 1]} : vector<2x2xf32> to vector<2x1xf32>
    %119 = vector.broadcast %118 : vector<2x1xf32> to vector<2x8xf32>
    %120 = vector.broadcast %2 : vector<1x8xf32> to vector<2x8xf32>
    %121 = arith.mulf %119, %120 : vector<2x8xf32>
    %122 = vector.extract_strided_slice %117 {offsets = [0, 1], sizes = [2, 1], strides = [1, 1]} : vector<2x2xf32> to vector<2x1xf32>
    %123 = vector.broadcast %122 : vector<2x1xf32> to vector<2x8xf32>
    %124 = vector.broadcast %3 : vector<1x8xf32> to vector<2x8xf32>
    %125 = arith.mulf %123, %124 : vector<2x8xf32>
    %126 = arith.addf %121, %125 : vector<2x8xf32>
    %127 = vector.extract_strided_slice %7 {offsets = [8, 0], sizes = [2, 8], strides = [1, 1]} : vector<16x8xf32> to vector<2x8xf32>
    %128 = arith.addf %127, %126 : vector<2x8xf32>
    %129 = vector.extract_strided_slice %128 {offsets = [0, 0], sizes = [2, 6], strides = [1, 1]} : vector<2x8xf32> to vector<2x6xf32>
    %130 = arith.negf %129 : vector<2x6xf32>
    %131 = math.exp %130 : vector<2x6xf32>
    %cst_12 = arith.constant 1.000000e+00 : f32
    %132 = vector.broadcast %cst_12 : f32 to vector<2x6xf32>
    %133 = arith.addf %132, %131 : vector<2x6xf32>
    %134 = arith.divf %132, %133 : vector<2x6xf32>
    %135 = vector.extract_strided_slice %134 {offsets = [0, 0], sizes = [2, 2], strides = [1, 1]} : vector<2x6xf32> to vector<2x2xf32>
    %136 = vector.extract_strided_slice %134 {offsets = [0, 2], sizes = [2, 2], strides = [1, 1]} : vector<2x6xf32> to vector<2x2xf32>
    %137 = vector.extract_strided_slice %134 {offsets = [0, 4], sizes = [2, 2], strides = [1, 1]} : vector<2x6xf32> to vector<2x2xf32>
    %138 = vector.extract_strided_slice %128 {offsets = [0, 6], sizes = [2, 2], strides = [1, 1]} : vector<2x8xf32> to vector<2x2xf32>
    %139 = math.tanh %138 : vector<2x2xf32>
    %140 = arith.mulf %136, %115 : vector<2x2xf32>
    %141 = arith.mulf %135, %139 : vector<2x2xf32>
    %142 = arith.addf %140, %141 : vector<2x2xf32>
    %143 = math.tanh %142 : vector<2x2xf32>
    %144 = arith.mulf %137, %143 : vector<2x2xf32>
    %145 = vector.extract_strided_slice %144 {offsets = [0, 0], sizes = [2, 1], strides = [1, 1]} : vector<2x2xf32> to vector<2x1xf32>
    %146 = vector.broadcast %145 : vector<2x1xf32> to vector<2x8xf32>
    %147 = vector.broadcast %2 : vector<1x8xf32> to vector<2x8xf32>
    %148 = arith.mulf %146, %147 : vector<2x8xf32>
    %149 = vector.extract_strided_slice %144 {offsets = [0, 1], sizes = [2, 1], strides = [1, 1]} : vector<2x2xf32> to vector<2x1xf32>
    %150 = vector.broadcast %149 : vector<2x1xf32> to vector<2x8xf32>
    %151 = vector.broadcast %3 : vector<1x8xf32> to vector<2x8xf32>
    %152 = arith.mulf %150, %151 : vector<2x8xf32>
    %153 = arith.addf %148, %152 : vector<2x8xf32>
    %154 = vector.extract_strided_slice %7 {offsets = [10, 0], sizes = [2, 8], strides = [1, 1]} : vector<16x8xf32> to vector<2x8xf32>
    %155 = arith.addf %154, %153 : vector<2x8xf32>
    %156 = vector.extract_strided_slice %155 {offsets = [0, 0], sizes = [2, 6], strides = [1, 1]} : vector<2x8xf32> to vector<2x6xf32>
    %157 = arith.negf %156 : vector<2x6xf32>
    %158 = math.exp %157 : vector<2x6xf32>
    %cst_13 = arith.constant 1.000000e+00 : f32
    %159 = vector.broadcast %cst_13 : f32 to vector<2x6xf32>
    %160 = arith.addf %159, %158 : vector<2x6xf32>
    %161 = arith.divf %159, %160 : vector<2x6xf32>
    %162 = vector.extract_strided_slice %161 {offsets = [0, 0], sizes = [2, 2], strides = [1, 1]} : vector<2x6xf32> to vector<2x2xf32>
    %163 = vector.extract_strided_slice %161 {offsets = [0, 2], sizes = [2, 2], strides = [1, 1]} : vector<2x6xf32> to vector<2x2xf32>
    %164 = vector.extract_strided_slice %161 {offsets = [0, 4], sizes = [2, 2], strides = [1, 1]} : vector<2x6xf32> to vector<2x2xf32>
    %165 = vector.extract_strided_slice %155 {offsets = [0, 6], sizes = [2, 2], strides = [1, 1]} : vector<2x8xf32> to vector<2x2xf32>
    %166 = math.tanh %165 : vector<2x2xf32>
    %167 = arith.mulf %163, %142 : vector<2x2xf32>
    %168 = arith.mulf %162, %166 : vector<2x2xf32>
    %169 = arith.addf %167, %168 : vector<2x2xf32>
    %170 = math.tanh %169 : vector<2x2xf32>
    %171 = arith.mulf %164, %170 : vector<2x2xf32>
    %172 = vector.extract_strided_slice %171 {offsets = [0, 0], sizes = [2, 1], strides = [1, 1]} : vector<2x2xf32> to vector<2x1xf32>
    %173 = vector.broadcast %172 : vector<2x1xf32> to vector<2x8xf32>
    %174 = vector.broadcast %2 : vector<1x8xf32> to vector<2x8xf32>
    %175 = arith.mulf %173, %174 : vector<2x8xf32>
    %176 = vector.extract_strided_slice %171 {offsets = [0, 1], sizes = [2, 1], strides = [1, 1]} : vector<2x2xf32> to vector<2x1xf32>
    %177 = vector.broadcast %176 : vector<2x1xf32> to vector<2x8xf32>
    %178 = vector.broadcast %3 : vector<1x8xf32> to vector<2x8xf32>
    %179 = arith.mulf %177, %178 : vector<2x8xf32>
    %180 = arith.addf %175, %179 : vector<2x8xf32>
    %181 = vector.extract_strided_slice %7 {offsets = [12, 0], sizes = [2, 8], strides = [1, 1]} : vector<16x8xf32> to vector<2x8xf32>
    %182 = arith.addf %181, %180 : vector<2x8xf32>
    %183 = vector.extract_strided_slice %182 {offsets = [0, 0], sizes = [2, 6], strides = [1, 1]} : vector<2x8xf32> to vector<2x6xf32>
    %184 = arith.negf %183 : vector<2x6xf32>
    %185 = math.exp %184 : vector<2x6xf32>
    %cst_14 = arith.constant 1.000000e+00 : f32
    %186 = vector.broadcast %cst_14 : f32 to vector<2x6xf32>
    %187 = arith.addf %186, %185 : vector<2x6xf32>
    %188 = arith.divf %186, %187 : vector<2x6xf32>
    %189 = vector.extract_strided_slice %188 {offsets = [0, 0], sizes = [2, 2], strides = [1, 1]} : vector<2x6xf32> to vector<2x2xf32>
    %190 = vector.extract_strided_slice %188 {offsets = [0, 2], sizes = [2, 2], strides = [1, 1]} : vector<2x6xf32> to vector<2x2xf32>
    %191 = vector.extract_strided_slice %188 {offsets = [0, 4], sizes = [2, 2], strides = [1, 1]} : vector<2x6xf32> to vector<2x2xf32>
    %192 = vector.extract_strided_slice %182 {offsets = [0, 6], sizes = [2, 2], strides = [1, 1]} : vector<2x8xf32> to vector<2x2xf32>
    %193 = math.tanh %192 : vector<2x2xf32>
    %194 = arith.mulf %190, %169 : vector<2x2xf32>
    %195 = arith.mulf %189, %193 : vector<2x2xf32>
    %196 = arith.addf %194, %195 : vector<2x2xf32>
    %197 = math.tanh %196 : vector<2x2xf32>
    %198 = arith.mulf %191, %197 : vector<2x2xf32>
    %199 = vector.extract_strided_slice %198 {offsets = [0, 0], sizes = [2, 1], strides = [1, 1]} : vector<2x2xf32> to vector<2x1xf32>
    %200 = vector.broadcast %199 : vector<2x1xf32> to vector<2x8xf32>
    %201 = vector.broadcast %2 : vector<1x8xf32> to vector<2x8xf32>
    %202 = arith.mulf %200, %201 : vector<2x8xf32>
    %203 = vector.extract_strided_slice %198 {offsets = [0, 1], sizes = [2, 1], strides = [1, 1]} : vector<2x2xf32> to vector<2x1xf32>
    %204 = vector.broadcast %203 : vector<2x1xf32> to vector<2x8xf32>
    %205 = vector.broadcast %3 : vector<1x8xf32> to vector<2x8xf32>
    %206 = arith.mulf %204, %205 : vector<2x8xf32>
    %207 = arith.addf %202, %206 : vector<2x8xf32>
    %208 = vector.extract_strided_slice %7 {offsets = [14, 0], sizes = [2, 8], strides = [1, 1]} : vector<16x8xf32> to vector<2x8xf32>
    %209 = arith.addf %208, %207 : vector<2x8xf32>
    %210 = vector.extract_strided_slice %209 {offsets = [0, 0], sizes = [2, 6], strides = [1, 1]} : vector<2x8xf32> to vector<2x6xf32>
    %211 = arith.negf %210 : vector<2x6xf32>
    %212 = math.exp %211 : vector<2x6xf32>
    %cst_15 = arith.constant 1.000000e+00 : f32
    %213 = vector.broadcast %cst_15 : f32 to vector<2x6xf32>
    %214 = arith.addf %213, %212 : vector<2x6xf32>
    %215 = arith.divf %213, %214 : vector<2x6xf32>
    %216 = vector.extract_strided_slice %215 {offsets = [0, 0], sizes = [2, 2], strides = [1, 1]} : vector<2x6xf32> to vector<2x2xf32>
    %217 = vector.extract_strided_slice %215 {offsets = [0, 2], sizes = [2, 2], strides = [1, 1]} : vector<2x6xf32> to vector<2x2xf32>
    %218 = vector.extract_strided_slice %215 {offsets = [0, 4], sizes = [2, 2], strides = [1, 1]} : vector<2x6xf32> to vector<2x2xf32>
    %219 = vector.extract_strided_slice %209 {offsets = [0, 6], sizes = [2, 2], strides = [1, 1]} : vector<2x8xf32> to vector<2x2xf32>
    %220 = math.tanh %219 : vector<2x2xf32>
    %221 = arith.mulf %217, %196 : vector<2x2xf32>
    %222 = arith.mulf %216, %220 : vector<2x2xf32>
    %223 = arith.addf %221, %222 : vector<2x2xf32>
    %224 = math.tanh %223 : vector<2x2xf32>
    %225 = arith.mulf %218, %224 : vector<2x2xf32>
    %cst_16 = arith.constant 0.000000e+00 : f32
    %226 = vector.broadcast %cst_16 : f32 to vector<2x2xf32>
    %227 = arith.maximumf %225, %226 : vector<2x2xf32>
    %228 = vector.extract_strided_slice %227 {offsets = [0, 0], sizes = [2, 1], strides = [1, 1]} : vector<2x2xf32> to vector<2x1xf32>
    %c0_17 = arith.constant 0 : index
    %c0_18 = arith.constant 0 : index
    %229 = vector.load %arg2[%c0_17, %c0_18] : memref<5x128xf32, #tpu.memory_space<vmem>>, vector<1x128xf32>
    %230 = vector.broadcast %228 : vector<2x1xf32> to vector<2x128xf32>
    %231 = vector.broadcast %229 : vector<1x128xf32> to vector<2x128xf32>
    %232 = arith.mulf %230, %231 : vector<2x128xf32>
    %233 = vector.extract_strided_slice %227 {offsets = [0, 1], sizes = [2, 1], strides = [1, 1]} : vector<2x2xf32> to vector<2x1xf32>
    %c1 = arith.constant 1 : index
    %c0_19 = arith.constant 0 : index
    %234 = vector.load %arg2[%c1, %c0_19] : memref<5x128xf32, #tpu.memory_space<vmem>>, vector<1x128xf32>
    %235 = vector.broadcast %233 : vector<2x1xf32> to vector<2x128xf32>
    %236 = vector.broadcast %234 : vector<1x128xf32> to vector<2x128xf32>
    %237 = arith.mulf %235, %236 : vector<2x128xf32>
    %238 = arith.addf %232, %237 : vector<2x128xf32>
    %c2 = arith.constant 2 : index
    %c0_20 = arith.constant 0 : index
    %239 = vector.load %arg2[%c2, %c0_20] : memref<5x128xf32, #tpu.memory_space<vmem>>, vector<1x128xf32>
    %240 = vector.broadcast %239 : vector<1x128xf32> to vector<2x128xf32>
    %241 = arith.addf %238, %240 : vector<2x128xf32>
    %cst_21 = arith.constant 0.000000e+00 : f32
    %242 = vector.broadcast %cst_21 : f32 to vector<2x128xf32>
    %243 = arith.maximumf %241, %242 : vector<2x128xf32>
    %c3 = arith.constant 3 : index
    %c0_22 = arith.constant 0 : index
    %244 = vector.load %arg2[%c3, %c0_22] : memref<5x128xf32, #tpu.memory_space<vmem>>, vector<1x128xf32>
    %245 = vector.broadcast %244 : vector<1x128xf32> to vector<2x128xf32>
    %246 = arith.mulf %243, %245 : vector<2x128xf32>
    %cst_23 = arith.constant dense<0.000000e+00> : vector<2xf32>
    %247 = vector.multi_reduction <add>, %246, %cst_23 [1] : vector<2x128xf32> to vector<2xf32>
    %248 = vector.shape_cast %247 : vector<2xf32> to vector<2x1xf32>
    %c4 = arith.constant 4 : index
    %c0_24 = arith.constant 0 : index
    %249 = vector.load %arg2[%c4, %c0_24] : memref<5x128xf32, #tpu.memory_space<vmem>>, vector<1x1xf32>
    %250 = vector.broadcast %249 : vector<1x1xf32> to vector<2x1xf32>
    %251 = arith.addf %248, %250 : vector<2x1xf32>
    %c0_25 = arith.constant 0 : index
    %c0_26 = arith.constant 0 : index
    %252 = vector.load %arg3[%c0_25, %c0_26] : memref<2x1xf32, #tpu.memory_space<vmem>>, vector<2x1xf32>
    tpu.vector_store %arg3[%c0_25, %c0_26], %251 {strides = array<i32>} : memref<2x1xf32, #tpu.memory_space<vmem>>, vector<2x1xf32>,
    return
  }
}

</mosaic_0001>

<llo_original>
// kernel: lstm_forward.1
$region0: #{lstm_forward.1}
  #allocation0 [shape = 'u32[]', space=smem, size = 0x4, offset = 0x4, fixed_abs, tag = 'smem constant byte address 0x4 - core index']
  #allocation1 [shape = 'u32[144,128]{1,0:T(1,128)}', space=vmem, size = 0x12000, scoped, tag = 'internal scratch']
  %s0 = inlined_call_operand.vmem [shape: f32[16,7], index: 0, kind: input, shape index: {}]
  %s1 = inlined_call_operand.vmem [shape: f32[10,8], index: 1, kind: input, shape index: {}]
  %s2 = inlined_call_operand.vmem [shape: f32[5,128], index: 2, kind: input, shape index: {}]
  %s3 = inlined_call_operand.vmem [shape: f32[2,1], index: 3, kind: output, shape index: {}]
  %s4 = sld [smem:[#allocation0]]
  $region22: #{lstm_forward.1} parent=0
    _
  %s6 = ssub.s32 1, %s4
  %s7 = scalar_select 0, %s6, %s4
  // Predicated region
  $region2: #{lstm_forward.1} parent=0 // pred_check
    _
  $region3: #{lstm_forward.1} parent=0 // pred_check_branch
    %9 = sbr.rel (0) target = $region5
  $region4: #{lstm_forward.1} parent=0 // pred_region
    _
  $region5: #{lstm_forward.1} parent=0 // pred_fallthru
    _
  // Predicated region
  $region6: #{lstm_forward.1} parent=0 // pred_check
    _
  $region7: #{lstm_forward.1} parent=0 // pred_check_branch
    %11 = sbr.rel (0) target = $region9
  $region8: #{lstm_forward.1} parent=0 // pred_region
    _
  $region9: #{lstm_forward.1} parent=0 // pred_fallthru
    _
  // Predicated region
  $region10: #{lstm_forward.1} parent=0 // pred_check
    _
  $region11: #{lstm_forward.1} parent=0 // pred_check_branch
    %13 = sbr.rel (0) target = $region13
  $region12: #{lstm_forward.1} parent=0 // pred_region
    _
  $region13: #{lstm_forward.1} parent=0 // pred_fallthru
    _
  %v14 = vld [vmem:[%s1] sm:$0x7f]
  %v15 = vld [vmem:[%s1 + $0x9] sm:$0x1]
  %v16 = vld [vmem:[%s1 + $0x7] sm:$0x1]
  %v17 = vld [vmem:[%s1 + $0x8] sm:$0x1]
  %v18 = vld [vmem:[%s0] sm:$0xff]
  %v19 = vld [vmem:[%s0 + $0x8] sm:$0xff]
  %v20 = vlaneseq
  %v21 = vshrl.u32 %v20, 7
  %v22 = vsub.s32 0, %v21
  %v23 = vrot.slane %v15, %v22
  %vm24 = vcmask 56320
  %v26 = vsel %vm24, %v18, 0
  %v29 = vsel %vm24, %v19, 0
  %vm31 = vcmask 1046528
  %v33 = vsel %vm31, %v14, 0
  %35 = vmatprep.subr.mxu0 0.0
  %36 = vmatpush1.msra.mxu0 0.0
  %37 = vmatprep.subr.mxu0 0.0
  %38 = vmatpush1.msra.mxu0 0.0
  %39 = vmatprep.subr.mxu0 0.0
  %40 = vmatpush1.msra.mxu0 0.0
  %41 = vmatprep.subr.mxu0 0.0
  %42 = vmatpush1.msra.mxu0 0.0
  %43 = vmatprep.subr.mxu0 0.0
  %44 = vmatpush1.msra.mxu0 0.0
  %45 = vmatprep.subr.mxu0 0.0
  %46 = vmatpush1.msra.mxu0 0.0
  %47 = vmatprep.subr.mxu0 0.0
  %48 = vmatpush1.msra.mxu0 0.0
  %49 = vmatprep.subr.mxu0 0.0
  %50 = vmatpush1.msra.mxu0 0.0
  %51 = vmatprep.subr.mxu0 0.0
  %52 = vmatpush1.msra.mxu0 0.0
  %53 = vmatprep.subr.mxu0 0.0
  %54 = vmatpush1.msra.mxu0 0.0
  %55 = vmatprep.subr.mxu0 0.0
  %56 = vmatpush1.msra.mxu0 0.0
  %57 = vmatprep.subr.mxu0 0.0
  %58 = vmatpush1.msra.mxu0 0.0
  %59 = vmatprep.subr.mxu0 0.0
  %60 = vmatpush1.msra.mxu0 0.0
  %61 = vmatprep.subr.mxu0 0.0
  %62 = vmatpush1.msra.mxu0 0.0
  %63 = vmatprep.subr.mxu0 0.0
  %64 = vmatpush1.msra.mxu0 0.0
  %65 = vmatprep.subr.mxu0 0.0
  %66 = vmatpush1.msra.mxu0 %v33
  %67 = vmatprep.subr.mxu0 0.0
  %68 = vmatpush2.msra.mxu0 0.0
  %69 = vmatprep.subr.mxu0 0.0
  %70 = vmatpush2.msra.mxu0 0.0
  %71 = vmatprep.subr.mxu0 0.0
  %72 = vmatpush2.msra.mxu0 0.0
  %73 = vmatprep.subr.mxu0 0.0
  %74 = vmatpush2.msra.mxu0 0.0
  %75 = vmatprep.subr.mxu0 0.0
  %76 = vmatpush2.msra.mxu0 0.0
  %77 = vmatprep.subr.mxu0 0.0
  %78 = vmatpush2.msra.mxu0 0.0
  %79 = vmatprep.subr.mxu0 0.0
  %80 = vmatpush2.msra.mxu0 0.0
  %81 = vmatprep.subr.mxu0 0.0
  %82 = vmatpush2.msra.mxu0 0.0
  %83 = vmatprep.subr.mxu0 0.0
  %84 = vmatpush2.msra.mxu0 0.0
  %85 = vmatprep.subr.mxu0 0.0
  %86 = vmatpush2.msra.mxu0 0.0
  %87 = vmatprep.subr.mxu0 0.0
  %88 = vmatpush2.msra.mxu0 0.0
  %89 = vmatprep.subr.mxu0 0.0
  %90 = vmatpush2.msra.mxu0 0.0
  %91 = vmatprep.subr.mxu0 0.0
  %92 = vmatpush2.msra.mxu0 0.0
  %93 = vmatprep.subr.mxu0 0.0
  %94 = vmatpush2.msra.mxu0 0.0
  %95 = vmatprep.subr.mxu0 0.0
  %96 = vmatpush2.msra.mxu0 0.0
  %97 = vmatprep.subr.mxu0 0.0
  %98 = vmatpush2.msra.mxu0 0.0
  %99 = vmatprep.mubr.f32.mxu0 0.0
  %100 = vmatmul.mubr.f32.gmra.mxu0 %v26
  %v101 = vpop.f32.mrf.mxu0
  %v102 = vadd.f32 %v23, %v101
  %v103 = vpop.f32.mrf.mxu0
  %104 = vmatprep.mubr.f32.mxu0 0.0
  %105 = vmatmul.mubr.f32.gmra.mxu0 %v29
  %v106 = vpop.f32.mrf.mxu0
  %v107 = vadd.f32 %v23, %v106
  %v108 = vpop.f32.mrf.mxu0
  %109 = vdwg.mxu0
  %v110 = vlaneseq
  %v111 = vshrl.u32 %v110, 7
  %v112 = vsub.s32 0, %v111
  %v113 = vrot.slane %v16, %v112
  %v114 = vmul.f32 %v113, 0.0
  %v115 = vlaneseq
  %v116 = vshrl.u32 %v115, 7
  %v117 = vsub.s32 0, %v116
  %v118 = vrot.slane %v17, %v117
  %v119 = vmul.f32 %v118, 0.0
  %v120 = vadd.f32 %v114, %v119
  %v121 = vadd.f32 %v102, %v120
  %v122 = vxor.u32 %v121, 2147483648
  %v123 = vmul.f32 %v122, 1.442695
  %v124 = vpow.pop %v123
  %v125 = vadd.f32 %v124, 1.0
  %v126 = vrcp.pop %v125
  %v127 = vmul.f32 1.0, %v126
  %v128 = vtanh.pop %v121
  %v129 = vmul.f32 %v127, 0.0
  %131 = vrot.lane.b32.xlu0 %v128, 122
  %v132 = vpop.permute.xlu0 %131
  %v134 = vmul.f32 %v127, %v132
  %136 = vrot.lane.b32.xlu0 %v134, 2
  %v137 = vpop.permute.xlu0 %136
  %v139 = vadd.f32 %v129, %v137
  %v140 = vtanh.pop %v139
  %142 = vrot.lane.b32.xlu0 %v140, 2
  %v143 = vpop.permute.xlu0 %142
  %v145 = vmul.f32 %v127, %v143
  %147 = vset.pattern.permute.xlu0 4
  %148 = vperm.xlu0 %147, %v145
  %v149 = vpop.permute.xlu0 %148
  %v151 = vmul.f32 %v149, %v113
  %152 = vset.pattern.permute.xlu0 5
  %153 = vperm.xlu0 %152, %v145
  %v154 = vpop.permute.xlu0 %153
  %v156 = vmul.f32 %v154, %v118
  %v157 = vadd.f32 %v151, %v156
  %v159 = vrot.slane %v157, 6
  %v161 = vadd.f32 %v102, %v159
  %v162 = vxor.u32 %v161, 2147483648
  %v163 = vmul.f32 %v162, 1.442695
  %v164 = vpow.pop %v163
  %v165 = vadd.f32 %v164, 1.0
  %v166 = vrcp.pop %v165
  %v167 = vmul.f32 1.0, %v166
  %v168 = vtanh.pop %v161
  %v170 = vrot.slane %v139, 6
  %v172 = vmul.f32 %v167, %v170
  %174 = vrot.lane.b32.xlu0 %v168, 122
  %v175 = vpop.permute.xlu0 %174
  %v177 = vmul.f32 %v167, %v175
  %179 = vrot.lane.b32.xlu0 %v177, 2
  %v180 = vpop.permute.xlu0 %179
  %v182 = vadd.f32 %v172, %v180
  %v183 = vtanh.pop %v182
  %185 = vrot.lane.b32.xlu0 %v183, 2
  %v186 = vpop.permute.xlu0 %185
  %v188 = vmul.f32 %v167, %v186
  %190 = vset.pattern.permute.xlu0 4
  %191 = vperm.xlu0 %190, %v188
  %v192 = vpop.permute.xlu0 %191
  %v194 = vmul.f32 %v192, %v113
  %195 = vset.pattern.permute.xlu0 5
  %196 = vperm.xlu0 %195, %v188
  %v197 = vpop.permute.xlu0 %196
  %v199 = vmul.f32 %v197, %v118
  %v200 = vadd.f32 %v194, %v199
  %v202 = vrot.slane %v200, 6
  %v204 = vadd.f32 %v102, %v202
  %v205 = vxor.u32 %v204, 2147483648
  %v206 = vmul.f32 %v205, 1.442695
  %v207 = vpow.pop %v206
  %v208 = vadd.f32 %v207, 1.0
  %v209 = vrcp.pop %v208
  %v210 = vmul.f32 1.0, %v209
  %v211 = vtanh.pop %v204
  %v213 = vrot.slane %v182, 6
  %v215 = vmul.f32 %v210, %v213
  %217 = vrot.lane.b32.xlu0 %v211, 122
  %v218 = vpop.permute.xlu0 %217
  %v220 = vmul.f32 %v210, %v218
  %222 = vrot.lane.b32.xlu0 %v220, 2
  %v223 = vpop.permute.xlu0 %222
  %v225 = vadd.f32 %v215, %v223
  %v226 = vtanh.pop %v225
  %228 = vrot.lane.b32.xlu0 %v226, 2
  %v229 = vpop.permute.xlu0 %228
  %v231 = vmul.f32 %v210, %v229
  %233 = vset.pattern.permute.xlu0 4
  %234 = vperm.xlu0 %233, %v231
  %v235 = vpop.permute.xlu0 %234
  %v237 = vmul.f32 %v235, %v113
  %238 = vset.pattern.permute.xlu0 5
  %239 = vperm.xlu0 %238, %v231
  %v240 = vpop.permute.xlu0 %239
  %v242 = vmul.f32 %v240, %v118
  %v243 = vadd.f32 %v237, %v242
  %v245 = vrot.slane %v243, 6
  %v247 = vadd.f32 %v102, %v245
  %v248 = vxor.u32 %v247, 2147483648
  %v249 = vmul.f32 %v248, 1.442695
  %v250 = vpow.pop %v249
  %v251 = vadd.f32 %v250, 1.0
  %v252 = vrcp.pop %v251
  %v253 = vmul.f32 1.0, %v252
  %v254 = vtanh.pop %v247
  %v256 = vrot.slane %v225, 6
  %v258 = vmul.f32 %v253, %v256
  %260 = vrot.lane.b32.xlu0 %v254, 122
  %v261 = vpop.permute.xlu0 %260
  %v263 = vmul.f32 %v253, %v261
  %265 = vrot.lane.b32.xlu0 %v263, 2
  %v266 = vpop.permute.xlu0 %265
  %v268 = vadd.f32 %v258, %v266
  %v269 = vtanh.pop %v268
  %271 = vrot.lane.b32.xlu0 %v269, 2
  %v272 = vpop.permute.xlu0 %271
  %v274 = vmul.f32 %v253, %v272
  %276 = vset.pattern.permute.xlu0 4
  %277 = vperm.xlu0 %276, %v274
  %v278 = vpop.permute.xlu0 %277
  %v280 = vmul.f32 %v278, %v113
  %281 = vset.pattern.permute.xlu0 5
  %282 = vperm.xlu0 %281, %v274
  %v283 = vpop.permute.xlu0 %282
  %v285 = vmul.f32 %v283, %v118
  %v286 = vadd.f32 %v280, %v285
  %v288 = vrot.slane %v286, 6
  %v290 = vadd.f32 %v107, %v288
  %v291 = vxor.u32 %v290, 2147483648
  %v292 = vmul.f32 %v291, 1.442695
  %v293 = vpow.pop %v292
  %v294 = vadd.f32 %v293, 1.0
  %v295 = vrcp.pop %v294
  %v296 = vmul.f32 1.0, %v295
  %v297 = vtanh.pop %v290
  %v299 = vrot.slane %v268, 6
  %v301 = vmul.f32 %v296, %v299
  %303 = vrot.lane.b32.xlu0 %v297, 122
  %v304 = vpop.permute.xlu0 %303
  %v306 = vmul.f32 %v296, %v304
  %308 = vrot.lane.b32.xlu0 %v306, 2
  %v309 = vpop.permute.xlu0 %308
  %v311 = vadd.f32 %v301, %v309
  %v312 = vtanh.pop %v311
  %314 = vrot.lane.b32.xlu0 %v312, 2
  %v315 = vpop.permute.xlu0 %314
  %v317 = vmul.f32 %v296, %v315
  %319 = vset.pattern.permute.xlu0 4
  %320 = vperm.xlu0 %319, %v317
  %v321 = vpop.permute.xlu0 %320
  %v323 = vmul.f32 %v321, %v113
  %324 = vset.pattern.permute.xlu0 5
  %325 = vperm.xlu0 %324, %v317
  %v326 = vpop.permute.xlu0 %325
  %v328 = vmul.f32 %v326, %v118
  %v329 = vadd.f32 %v323, %v328
  %v331 = vrot.slane %v329, 6
  %v333 = vadd.f32 %v107, %v331
  %v334 = vxor.u32 %v333, 2147483648
  %v335 = vmul.f32 %v334, 1.442695
  %v336 = vpow.pop %v335
  %v337 = vadd.f32 %v336, 1.0
  %v338 = vrcp.pop %v337
  %v339 = vmul.f32 1.0, %v338
  %v340 = vtanh.pop %v333
  %v342 = vrot.slane %v311, 6
  %v344 = vmul.f32 %v339, %v342
  %346 = vrot.lane.b32.xlu0 %v340, 122
  %v347 = vpop.permute.xlu0 %346
  %v349 = vmul.f32 %v339, %v347
  %351 = vrot.lane.b32.xlu0 %v349, 2
  %v352 = vpop.permute.xlu0 %351
  %v354 = vadd.f32 %v344, %v352
  %v355 = vtanh.pop %v354
  %357 = vrot.lane.b32.xlu0 %v355, 2
  %v358 = vpop.permute.xlu0 %357
  %v360 = vmul.f32 %v339, %v358
  %362 = vset.pattern.permute.xlu0 4
  %363 = vperm.xlu0 %362, %v360
  %v364 = vpop.permute.xlu0 %363
  %v366 = vmul.f32 %v364, %v113
  %367 = vset.pattern.permute.xlu0 5
  %368 = vperm.xlu0 %367, %v360
  %v369 = vpop.permute.xlu0 %368
  %v371 = vmul.f32 %v369, %v118
  %v372 = vadd.f32 %v366, %v371
  %v374 = vrot.slane %v372, 6
  %v376 = vadd.f32 %v107, %v374
  %v377 = vxor.u32 %v376, 2147483648
  %v378 = vmul.f32 %v377, 1.442695
  %v379 = vpow.pop %v378
  %v380 = vadd.f32 %v379, 1.0
  %v381 = vrcp.pop %v380
  %v382 = vmul.f32 1.0, %v381
  %v383 = vtanh.pop %v376
  %v385 = vrot.slane %v354, 6
  %v387 = vmul.f32 %v382, %v385
  %389 = vrot.lane.b32.xlu0 %v383, 122
  %v390 = vpop.permute.xlu0 %389
  %v392 = vmul.f32 %v382, %v390
  %394 = vrot.lane.b32.xlu0 %v392, 2
  %v395 = vpop.permute.xlu0 %394
  %v397 = vadd.f32 %v387, %v395
  %v398 = vtanh.pop %v397
  %400 = vrot.lane.b32.xlu0 %v398, 2
  %v401 = vpop.permute.xlu0 %400
  %v403 = vmul.f32 %v382, %v401
  %405 = vset.pattern.permute.xlu0 4
  %406 = vperm.xlu0 %405, %v403
  %v407 = vpop.permute.xlu0 %406
  %v409 = vmul.f32 %v407, %v113
  %410 = vset.pattern.permute.xlu0 5
  %411 = vperm.xlu0 %410, %v403
  %v412 = vpop.permute.xlu0 %411
  %v414 = vmul.f32 %v412, %v118
  %v415 = vadd.f32 %v409, %v414
  %v417 = vrot.slane %v415, 6
  %v419 = vadd.f32 %v107, %v417
  %v420 = vxor.u32 %v419, 2147483648
  %v421 = vmul.f32 %v420, 1.442695
  %v422 = vpow.pop %v421
  %v423 = vadd.f32 %v422, 1.0
  %v424 = vrcp.pop %v423
  %v425 = vmul.f32 1.0, %v424
  %v426 = vtanh.pop %v419
  %v428 = vrot.slane %v397, 6
  %v430 = vmul.f32 %v425, %v428
  %432 = vrot.lane.b32.xlu0 %v426, 122
  %v433 = vpop.permute.xlu0 %432
  %v435 = vmul.f32 %v425, %v433
  %437 = vrot.lane.b32.xlu0 %v435, 2
  %v438 = vpop.permute.xlu0 %437
  %v440 = vadd.f32 %v430, %v438
  %v441 = vtanh.pop %v440
  %443 = vrot.lane.b32.xlu0 %v441, 2
  %v444 = vpop.permute.xlu0 %443
  %v446 = vmul.f32 %v425, %v444
  %v447 = vmax.f32 %v446, 0.0
  %v448 = vld [vmem:[%s2] sm:$0x1]
  %450 = vset.pattern.permute.xlu0 4
  %451 = vperm.xlu0 %450, %v447
  %v452 = vpop.permute.xlu0 %451
  %v454 = vlaneseq
  %v455 = vshrl.u32 %v454, 7
  %v456 = vsub.s32 0, %v455
  %v457 = vrot.slane %v448, %v456
  %v458 = vmul.f32 %v452, %v457
  %v459 = vld [vmem:[%s2 + $0x1] sm:$0x1]
  %460 = vset.pattern.permute.xlu0 5
  %461 = vperm.xlu0 %460, %v447
  %v462 = vpop.permute.xlu0 %461
  %v464 = vlaneseq
  %v465 = vshrl.u32 %v464, 7
  %v466 = vsub.s32 0, %v465
  %v467 = vrot.slane %v459, %v466
  %v468 = vmul.f32 %v462, %v467
  %v469 = vadd.f32 %v458, %v468
  %v470 = vld [vmem:[%s2 + $0x2] sm:$0x1]
  %v471 = vlaneseq
  %v472 = vshrl.u32 %v471, 7
  %v473 = vsub.s32 0, %v472
  %v474 = vrot.slane %v470, %v473
  %v475 = vadd.f32 %v469, %v474
  %v476 = vmax.f32 %v475, 0.0
  %v477 = vld [vmem:[%s2 + $0x3] sm:$0x1]
  %v478 = vlaneseq
  %v479 = vshrl.u32 %v478, 7
  %v480 = vsub.s32 0, %v479
  %v481 = vrot.slane %v477, %v480
  %v482 = vmul.f32 %v476, %v481
  %vm483 = vcmask 1047558
  %v484 = vsel %vm483, %v482, 0.0
  %485 = vadd.xlane.f32.xlu0 %v484
  %v486 = vpop.xlane.xlu0 %485
  %v487 = vld [vmem:[%s2 + $0x4] sm:$0x1]
  %v488 = vlaneseq
  %v489 = vshrl.u32 %v488, 7
  %v490 = vsub.s32 0, %v489
  %v491 = vrot.slane %v487, %v490
  %v492 = vadd.f32 %v486, %v491
  %vm493 = vcmask 7174
  %494 = vst.msk [vmem:[%s3 - $0x6] sm:$0xc0] %vm493, %v492
  // Predicated region
  $region14: #{lstm_forward.1} parent=0 // pred_check
    _
  $region15: #{lstm_forward.1} parent=0 // pred_check_branch
    %496 = sbr.rel (0) target = $region17
  $region16: #{lstm_forward.1} parent=0 // pred_region
    _
  $region17: #{lstm_forward.1} parent=0 // pred_fallthru
    _
  // Predicated region
  $region18: #{lstm_forward.1} parent=0 // pred_check
    _
  $region19: #{lstm_forward.1} parent=0 // pred_check_branch
    %498 = sbr.rel (0) target = $region21
  $region20: #{lstm_forward.1} parent=0 // pred_region
    _
  $region21: #{lstm_forward.1} parent=0 // pred_fallthru
    _

</llo_original>
